<compile_context>
chip_gen: v7x
topology: tpu7x:2x2x1
jax: 0.10.0
libtpu: 0.0.40
codegen_flags: <defaults>
</compile_context>

<pallas_src>
import math
import jax
import jax.numpy as jnp
from jax.experimental import pallas as pl
from jax.experimental.pallas import tpu as pltpu

IN_FEATURES = 64      # == out_features in the torch module (fc1 input dim)
HIDDEN = 128
OUT_FEATURES = 64


def _gelu_exact(x):
    # nn.GELU() default: exact erf-based GELU
    return 0.5 * x * (1.0 + jax.lax.erf(x * (1.0 / math.sqrt(2.0))))


def mlp_kernel(x_ref, w1_ref, b1_ref, w2_ref, b2_ref, o_ref):
    x = x_ref[...]                                                    # (tm, C_in)
    h = jnp.dot(x, w1_ref[...], preferred_element_type=jnp.float32)  # (tm, H) on MXU
    h = h + b1_ref[...]                                               # bias broadcast (1, H)
    h = _gelu_exact(h)
    # TODO(synk): dropout is identity in inference; training-mode RNG dropout not emitted.
    o = jnp.dot(h, w2_ref[...], preferred_element_type=jnp.float32)  # (tm, C_out)
    o = o + b2_ref[...]
    o_ref[...] = o.astype(o_ref.dtype)


def _round_up(a, b):
    return ((a + b - 1) // b) * b


def mlp_pallas(x, w1, b1, w2, b2, *, tm=512):
    """x: (B, N, C_in) float32. Returns (B, N, C_out)."""
    B, N, C_in = x.shape
    H = w1.shape[1]
    C_out = w2.shape[1]
    M = B * N

    # Adaptive row tile: big default (512 rows -> ~128 KB x-block, full MXU
    # M-occupancy), shrunk to a multiple of 8 for tiny inputs. Rows are padded
    # to a multiple of the tile and the pad is sliced off afterwards.
    tm_eff = min(tm, max(8, _round_up(M, 8)))
    Mp = _round_up(M, tm_eff)

    x2 = x.reshape(M, C_in)
    if Mp != M:
        x2 = jnp.pad(x2, ((0, Mp - M), (0, 0)))
    b1_2d = b1.reshape(1, H)
    b2_2d = b2.reshape(1, C_out)

    cost = pl.CostEstimate(
        flops=2 * Mp * (C_in * H + H * C_out),
        transcendentals=Mp * H,
        bytes_accessed=4 * (Mp * C_in + Mp * C_out + C_in * H + H * C_out + H + C_out),
    )

    out = pl.pallas_call(
        mlp_kernel,
        out_shape=jax.ShapeDtypeStruct((Mp, C_out), x.dtype),
        grid_spec=pltpu.PrefetchScalarGridSpec(
            num_scalar_prefetch=0,
            grid=(Mp // tm_eff,),
            in_specs=[
                pl.BlockSpec((tm_eff, C_in), lambda i: (i, 0)),
                # weights/biases: constant block index -> stay resident in VMEM
                pl.BlockSpec((C_in, H), lambda i: (0, 0)),
                pl.BlockSpec((1, H), lambda i: (0, 0)),
                pl.BlockSpec((H, C_out), lambda i: (0, 0)),
                pl.BlockSpec((1, C_out), lambda i: (0, 0)),
            ],
            out_specs=pl.BlockSpec((tm_eff, C_out), lambda i: (i, 0)),
        ),
        compiler_params=pltpu.CompilerParams(
            dimension_semantics=("parallel",),
        ),
        cost_estimate=cost,
    )(x2, w1, b1_2d, w2, b2_2d)

    if Mp != M:
        out = out[:M]
    return out.reshape(B, N, C_out)


def init_params(key):
    """Deterministic init mimicking nn.Linear defaults (uniform +/- 1/sqrt(fan_in))."""
    k1, k2, k3, k4 = jax.random.split(key, 4)
    bound1 = 1.0 / math.sqrt(IN_FEATURES)
    bound2 = 1.0 / math.sqrt(HIDDEN)
    # stored as (in, out) i.e. transpose of torch's (out, in)
    w1 = jax.random.uniform(k1, (IN_FEATURES, HIDDEN), jnp.float32, -bound1, bound1)
    b1 = jax.random.uniform(k2, (HIDDEN,), jnp.float32, -bound1, bound1)
    w2 = jax.random.uniform(k3, (HIDDEN, OUT_FEATURES), jnp.float32, -bound2, bound2)
    b2 = jax.random.uniform(k4, (OUT_FEATURES,), jnp.float32, -bound2, bound2)
    return w1, b1, w2, b2


def mlp_reference(x, w1, b1, w2, b2):
    h = x @ w1 + b1
    h = _gelu_exact(h)
    return h @ w2 + b2


if __name__ == "__main__":
    key = jax.random.PRNGKey(0)
    kx, kx2, kp = jax.random.split(key, 3)
    w1, b1, w2, b2 = init_params(kp)

    # Small case (exercises the adaptive small-tile path).
    B, N = 2, 8
    x = jax.random.normal(kx, (B, N, IN_FEATURES), jnp.float32)
    y = jax.block_until_ready(mlp_pallas(x, w1, b1, w2, b2))
    y_ref = mlp_reference(x, w1, b1, w2, b2)
    assert y.shape == (B, N, OUT_FEATURES)
    assert jnp.allclose(y, y_ref, atol=1e-5, rtol=1e-5), "mismatch vs reference (small)"

    # Larger, non-tile-multiple case (exercises the tm=512 + row-padding path).
    B2, N2 = 2, 600   # M = 1200 -> padded to 1536, grid = 3
    xl = jax.random.normal(kx2, (B2, N2, IN_FEATURES), jnp.float32)
    yl = jax.block_until_ready(mlp_pallas(xl, w1, b1, w2, b2))
    yl_ref = mlp_reference(xl, w1, b1, w2, b2)
    assert yl.shape == (B2, N2, OUT_FEATURES)
    assert jnp.allclose(yl, yl_ref, atol=1e-5, rtol=1e-5), "mismatch vs reference (large)"

    print("KERNEL_OK")
</pallas_src>

<mosaic_0001>
module attributes {stable_mosaic.version = 11 : i64} {
  func.func @mlp_kernel(%arg0: i32, %arg1: memref<16x64xf32, #tpu.memory_space<vmem>>, %arg2: memref<64x128xf32, #tpu.memory_space<vmem>>, %arg3: memref<1x128xf32, #tpu.memory_space<vmem>>, %arg4: memref<128x64xf32, #tpu.memory_space<vmem>>, %arg5: memref<1x64xf32, #tpu.memory_space<vmem>>, %arg6: memref<16x64xf32, #tpu.memory_space<vmem>>) attributes {dimension_semantics = [#tpu.dimension_semantics<parallel>], iteration_bounds = array<i64: 1>, scalar_prefetch = 0 : i64, scratch_operands = 0 : i64, tpu.core_type = #tpu.core_type<tc>, window_params = [{transform_indices = @transform_0, window_bounds = array<i64: 16, 64>}, {pipeline_mode = #tpu.pipeline_mode<synchronous>, transform_indices = @transform_1, window_bounds = array<i64: 64, 128>}, {pipeline_mode = #tpu.pipeline_mode<synchronous>, transform_indices = @transform_2, window_bounds = array<i64: 1, 128>}, {pipeline_mode = #tpu.pipeline_mode<synchronous>, transform_indices = @transform_3, window_bounds = array<i64: 128, 64>}, {pipeline_mode = #tpu.pipeline_mode<synchronous>, transform_indices = @transform_4, window_bounds = array<i64: 1, 64>}, {transform_indices = @transform_5, window_bounds = array<i64: 16, 64>}]} {
    %c0 = arith.constant 0 : index
    %c0_0 = arith.constant 0 : index
    %0 = vector.load %arg1[%c0, %c0_0] : memref<16x64xf32, #tpu.memory_space<vmem>>, vector<16x64xf32>
    %c0_1 = arith.constant 0 : index
    %c0_2 = arith.constant 0 : index
    %1 = vector.load %arg2[%c0_1, %c0_2] : memref<64x128xf32, #tpu.memory_space<vmem>>, vector<64x128xf32>
    %cst = arith.constant dense<0.000000e+00> : vector<16x128xf32>
    %2 = tpu.matmul %0, %1, %cst {dimension_numbers = #tpu.dot_dimension_numbers<[1], [0], [0], [1], [0, 0, 1, 1], [], []>} : vector<16x64xf32>, vector<64x128xf32>, vector<16x128xf32> -> vector<16x128xf32>
    %c0_3 = arith.constant 0 : index
    %c0_4 = arith.constant 0 : index
    %3 = vector.load %arg3[%c0_3, %c0_4] : memref<1x128xf32, #tpu.memory_space<vmem>>, vector<1x128xf32>
    %4 = vector.broadcast %3 : vector<1x128xf32> to vector<16x128xf32>
    %5 = arith.addf %2, %4 : vector<16x128xf32>
    %cst_5 = arith.constant 5.000000e-01 : f32
    %6 = vector.broadcast %cst_5 : f32 to vector<16x128xf32>
    %7 = arith.mulf %6, %5 : vector<16x128xf32>
    %cst_6 = arith.constant 0.707106769 : f32
    %8 = vector.broadcast %cst_6 : f32 to vector<16x128xf32>
    %9 = arith.mulf %5, %8 : vector<16x128xf32>
    %10 = math.erf %9 : vector<16x128xf32>
    %cst_7 = arith.constant 1.000000e+00 : f32
    %11 = vector.broadcast %cst_7 : f32 to vector<16x128xf32>
    %12 = arith.addf %11, %10 : vector<16x128xf32>
    %13 = arith.mulf %7, %12 : vector<16x128xf32>
    %c0_8 = arith.constant 0 : index
    %c0_9 = arith.constant 0 : index
    %14 = vector.load %arg4[%c0_8, %c0_9] : memref<128x64xf32, #tpu.memory_space<vmem>>, vector<128x64xf32>
    %cst_10 = arith.constant dense<0.000000e+00> : vector<16x64xf32>
    %15 = tpu.matmul %13, %14, %cst_10 {dimension_numbers = #tpu.dot_dimension_numbers<[1], [0], [0], [1], [0, 0, 1, 1], [], []>} : vector<16x128xf32>, vector<128x64xf32>, vector<16x64xf32> -> vector<16x64xf32>
    %c0_11 = arith.constant 0 : index
    %c0_12 = arith.constant 0 : index
    %16 = vector.load %arg5[%c0_11, %c0_12] : memref<1x64xf32, #tpu.memory_space<vmem>>, vector<1x64xf32>
    %17 = vector.broadcast %16 : vector<1x64xf32> to vector<16x64xf32>
    %18 = arith.addf %15, %17 : vector<16x64xf32>
    %c0_13 = arith.constant 0 : index
    %c0_14 = arith.constant 0 : index
    %19 = vector.load %arg6[%c0_13, %c0_14] : memref<16x64xf32, #tpu.memory_space<vmem>>, vector<16x64xf32>
    tpu.vector_store %arg6[%c0_13, %c0_14], %18 {strides = array<i32>} : memref<16x64xf32, #tpu.memory_space<vmem>>, vector<16x64xf32>,
    return
  }
  func.func @transform_0(%arg0: i32) -> (i32, i32) {
    %c0_i32 = arith.constant 0 : i32
    %c0_i32_0 = arith.constant 0 : i32
    return %arg0, %c0_i32 : i32, i32
  }
  func.func @transform_1(%arg0: i32) -> (i32, i32) {
    %c0_i32 = arith.constant 0 : i32
    %c0_i32_0 = arith.constant 0 : i32
    %c0_i32_1 = arith.constant 0 : i32
    return %c0_i32, %c0_i32_0 : i32, i32
  }
  func.func @transform_2(%arg0: i32) -> (i32, i32) {
    %c0_i32 = arith.constant 0 : i32
    %c0_i32_0 = arith.constant 0 : i32
    %c0_i32_1 = arith.constant 0 : i32
    return %c0_i32, %c0_i32_0 : i32, i32
  }
  func.func @transform_3(%arg0: i32) -> (i32, i32) {
    %c0_i32 = arith.constant 0 : i32
    %c0_i32_0 = arith.constant 0 : i32
    %c0_i32_1 = arith.constant 0 : i32
    return %c0_i32, %c0_i32_0 : i32, i32
  }
  func.func @transform_4(%arg0: i32) -> (i32, i32) {
    %c0_i32 = arith.constant 0 : i32
    %c0_i32_0 = arith.constant 0 : i32
    %c0_i32_1 = arith.constant 0 : i32
    return %c0_i32, %c0_i32_0 : i32, i32
  }
  func.func @transform_5(%arg0: i32) -> (i32, i32) {
    %c0_i32 = arith.constant 0 : i32
    %c0_i32_0 = arith.constant 0 : i32
    return %arg0, %c0_i32 : i32, i32
  }
}

</mosaic_0001>

<llo_original>
// kernel: tpu_custom_call.1
$region0: #{tpu_custom_call.1}
  #allocation0 [shape = 'u32[]', space=smem, size = 0x4, offset = 0x4, fixed_abs, tag = 'smem constant byte address 0x4 - core index']
  #allocation1 [shape = 'u32[144,128]{1,0:T(1,128)}', space=vmem, size = 0x12000, scoped, tag = 'internal scratch']
  %s0 = inlined_call_operand.vmem [shape: f32[16,64], index: 0, kind: input, shape index: {}]
  %s1 = inlined_call_operand.vmem [shape: f32[64,128], index: 1, kind: input, shape index: {}]
  %s2 = inlined_call_operand.vmem [shape: f32[1,128], index: 2, kind: input, shape index: {}]
  %s3 = inlined_call_operand.vmem [shape: f32[128,64], index: 3, kind: input, shape index: {}]
  %s4 = inlined_call_operand.vmem [shape: f32[1,64], index: 4, kind: input, shape index: {}]
  %s5 = inlined_call_operand.hbm [shape: f32[16,64], index: 5, kind: output, shape index: {}]
  %s6 = sld [smem:[#allocation0]]
  $region30: #{tpu_custom_call.1} parent=0
    _
  %s8 = ssub.s32 1, %s6
  %s9 = scalar_select 0, %s8, %s6
  $region1: #{tpu_custom_call.1} parent=0
    #allocation2 [shape = 'u8[8192]{0}', space=vmem, size = 0x2000, scoped, tag = 'output window, operand 0, single buffered']
    #allocation3 [shape = 's32[1]{0}', space=sflag, size = 0x4, scoped, tag = 'scoped memory for tpu_custom_call.1']
    %10 = vsyncpa [#allocation3], 0
    // Predicated region
    $region2: #{tpu_custom_call.1} parent=1 // pred_check
      _
    $region3: #{tpu_custom_call.1} parent=1 // pred_check_branch
      %12 = sbr.rel (0) target = $region5
    $region4: #{tpu_custom_call.1} parent=1 // pred_region
      _
    $region5: #{tpu_custom_call.1} parent=1 // pred_fallthru
      _
    // Predicated region
    $region6: #{tpu_custom_call.1} parent=1 // pred_check
      _
    $region7: #{tpu_custom_call.1} parent=1 // pred_check_branch
      %14 = sbr.rel (0) target = $region9
    $region8: #{tpu_custom_call.1} parent=1 // pred_region
      _
    $region9: #{tpu_custom_call.1} parent=1 // pred_fallthru
      _
    // Predicated region
    $region10: #{tpu_custom_call.1} parent=1 // pred_check
      _
    $region11: #{tpu_custom_call.1} parent=1 // pred_check_branch
      %16 = sbr.rel (0) target = $region13
    $region12: #{tpu_custom_call.1} parent=1 // pred_region
      _
    $region13: #{tpu_custom_call.1} parent=1 // pred_fallthru
      _
    // Predicated region
    $region14: #{tpu_custom_call.1} parent=1 // pred_check
      _
    $region15: #{tpu_custom_call.1} parent=1 // pred_check_branch
      %18 = sbr.rel (0) target = $region17
    $region16: #{tpu_custom_call.1} parent=1 // pred_region
      _
    $region17: #{tpu_custom_call.1} parent=1 // pred_fallthru
      _
    // Predicated region
    $region18: #{tpu_custom_call.1} parent=1 // pred_check
      _
    $region19: #{tpu_custom_call.1} parent=1 // pred_check_branch
      %20 = sbr.rel (0) target = $region21
    $region20: #{tpu_custom_call.1} parent=1 // pred_region
      _
    $region21: #{tpu_custom_call.1} parent=1 // pred_fallthru
      _
    %v21 = vld [vmem:[%s0] sm:$0xff]
    %v22 = vld [vmem:[%s0 + $0x8] sm:$0xff]
    %v23 = vld [vmem:[%s1] sm:$0xff]
    %v24 = vld [vmem:[%s1 + $0x8] sm:$0xff]
    %v25 = vld [vmem:[%s1 + $0x10] sm:$0xff]
    %v26 = vld [vmem:[%s1 + $0x18] sm:$0xff]
    %v27 = vld [vmem:[%s1 + $0x20] sm:$0xff]
    %v28 = vld [vmem:[%s1 + $0x28] sm:$0xff]
    %v29 = vld [vmem:[%s1 + $0x30] sm:$0xff]
    %v30 = vld [vmem:[%s1 + $0x38] sm:$0xff]
    %v31 = vld [vmem:[%s2] sm:$0x1]
    %v33 = vlaneseq
    %v34 = vshrl.u32 %v33, 7
    %v35 = vsub.s32 0, %v34
    %v36 = vrot.slane %v31, %v35
    %vm38 = vcmask 523264
    %v40 = vsel %vm38, %v21, 0
    %v43 = vsel %vm38, %v22, 0
    %45 = vmatprep.subr.mxu0 0.0
    %46 = vmatpush1.msra.mxu0 %v23
    %47 = vmatprep.subr.mxu0 0.0
    %48 = vmatpush1.msra.mxu0 %v24
    %49 = vmatprep.subr.mxu0 0.0
    %50 = vmatpush1.msra.mxu0 %v25
    %51 = vmatprep.subr.mxu0 0.0
    %52 = vmatpush1.msra.mxu0 %v26
    %53 = vmatprep.subr.mxu0 0.0
    %54 = vmatpush1.msra.mxu0 %v27
    %55 = vmatprep.subr.mxu0 0.0
    %56 = vmatpush1.msra.mxu0 %v28
    %57 = vmatprep.subr.mxu0 0.0
    %58 = vmatpush1.msra.mxu0 %v29
    %59 = vmatprep.subr.mxu0 0.0
    %60 = vmatpush1.msra.mxu0 %v30
    %61 = vmatprep.subr.mxu0 0.0
    %62 = vmatpush1.msra.mxu0 0.0
    %63 = vmatprep.subr.mxu0 0.0
    %64 = vmatpush1.msra.mxu0 0.0
    %65 = vmatprep.subr.mxu0 0.0
    %66 = vmatpush1.msra.mxu0 0.0
    %67 = vmatprep.subr.mxu0 0.0
    %68 = vmatpush1.msra.mxu0 0.0
    %69 = vmatprep.subr.mxu0 0.0
    %70 = vmatpush1.msra.mxu0 0.0
    %71 = vmatprep.subr.mxu0 0.0
    %72 = vmatpush1.msra.mxu0 0.0
    %73 = vmatprep.subr.mxu0 0.0
    %74 = vmatpush1.msra.mxu0 0.0
    %75 = vmatprep.subr.mxu0 0.0
    %76 = vmatpush1.msra.mxu0 0.0
    %77 = vmatprep.subr.mxu0 0.0
    %78 = vmatpush1.msra.mxu0 0.0
    %79 = vmatprep.subr.mxu0 0.0
    %80 = vmatpush1.msra.mxu0 0.0
    %81 = vmatprep.subr.mxu0 0.0
    %82 = vmatpush1.msra.mxu0 0.0
    %83 = vmatprep.subr.mxu0 0.0
    %84 = vmatpush1.msra.mxu0 0.0
    %85 = vmatprep.subr.mxu0 0.0
    %86 = vmatpush1.msra.mxu0 0.0
    %87 = vmatprep.subr.mxu0 0.0
    %88 = vmatpush1.msra.mxu0 0.0
    %89 = vmatprep.subr.mxu0 0.0
    %90 = vmatpush1.msra.mxu0 0.0
    %91 = vmatprep.subr.mxu0 0.0
    %92 = vmatpush1.msra.mxu0 0.0
    %93 = vmatprep.subr.mxu0 0.0
    %94 = vmatpush1.msra.mxu0 0.0
    %95 = vmatprep.subr.mxu0 0.0
    %96 = vmatpush1.msra.mxu0 0.0
    %97 = vmatprep.subr.mxu0 0.0
    %98 = vmatpush1.msra.mxu0 0.0
    %99 = vmatprep.subr.mxu0 0.0
    %100 = vmatpush1.msra.mxu0 0.0
    %101 = vmatprep.subr.mxu0 0.0
    %102 = vmatpush1.msra.mxu0 0.0
    %103 = vmatprep.subr.mxu0 0.0
    %104 = vmatpush1.msra.mxu0 0.0
    %105 = vmatprep.subr.mxu0 0.0
    %106 = vmatpush1.msra.mxu0 0.0
    %107 = vmatprep.subr.mxu0 0.0
    %108 = vmatpush1.msra.mxu0 0.0
    %109 = vmatprep.mubr.f32.mxu0 0.0
    %110 = vmatmul.mubr.f32.gmra.mrb[0].mxu0 %v40
    %v111 = vpop.f32.mrb[0].mxu0
    %v112 = vadd.f32 %v36, %v111
    %v113 = vpop.f32.mrb[0].mxu0
    %114 = vmatprep.mubr.f32.mxu0 0.0
    %115 = vmatmul.mubr.f32.gmra.mrb[0].mxu0 %v43
    %v116 = vpop.f32.mrb[0].mxu0
    %v117 = vadd.f32 %v36, %v116
    %v118 = vpop.f32.mrb[0].mxu0
    %119 = vdwg.mxu0
    %v120 = vmul.f32 %v112, 0.5
    %v121 = vmul.f32 %v117, 0.5
    %v122 = vmul.f32 %v112, 0.70710677
    %v123 = vmul.f32 %v117, 0.70710677
    %v124 = verf.f32.pop %v122
    %v125 = verf.f32.pop %v123
    %v126 = vadd.f32 %v124, 1.0
    %v127 = vadd.f32 %v125, 1.0
    %v128 = vmul.f32 %v120, %v126
    %v129 = vmul.f32 %v121, %v127
    %v130 = vld [vmem:[%s3] sm:$0xff]
    %v131 = vld [vmem:[%s3 + $0x8] sm:$0xff]
    %v132 = vld [vmem:[%s3 + $0x10] sm:$0xff]
    %v133 = vld [vmem:[%s3 + $0x18] sm:$0xff]
    %v134 = vld [vmem:[%s3 + $0x20] sm:$0xff]
    %v135 = vld [vmem:[%s3 + $0x28] sm:$0xff]
    %v136 = vld [vmem:[%s3 + $0x30] sm:$0xff]
    %v137 = vld [vmem:[%s3 + $0x38] sm:$0xff]
    %v138 = vld [vmem:[%s3 + $0x40] sm:$0xff]
    %v139 = vld [vmem:[%s3 + $0x48] sm:$0xff]
    %v140 = vld [vmem:[%s3 + $0x50] sm:$0xff]
    %v141 = vld [vmem:[%s3 + $0x58] sm:$0xff]
    %v142 = vld [vmem:[%s3 + $0x60] sm:$0xff]
    %v143 = vld [vmem:[%s3 + $0x68] sm:$0xff]
    %v144 = vld [vmem:[%s3 + $0x70] sm:$0xff]
    %v145 = vld [vmem:[%s3 + $0x78] sm:$0xff]
    %v146 = vld [vmem:[%s4] sm:$0x1]
    %v148 = vlaneseq
    %v149 = vshrl.u32 %v148, 7
    %v150 = vsub.s32 0, %v149
    %v151 = vrot.slane %v146, %v150
    %153 = vmatprep.subr.mxu0 0.0
    %154 = vmatpush1.msra.mxu0 %v130
    %155 = vmatprep.subr.mxu0 0.0
    %156 = vmatpush1.msra.mxu0 %v131
    %157 = vmatprep.subr.mxu0 0.0
    %158 = vmatpush1.msra.mxu0 %v132
    %159 = vmatprep.subr.mxu0 0.0
    %160 = vmatpush1.msra.mxu0 %v133
    %161 = vmatprep.subr.mxu0 0.0
    %162 = vmatpush1.msra.mxu0 %v134
    %163 = vmatprep.subr.mxu0 0.0
    %164 = vmatpush1.msra.mxu0 %v135
    %165 = vmatprep.subr.mxu0 0.0
    %166 = vmatpush1.msra.mxu0 %v136
    %167 = vmatprep.subr.mxu0 0.0
    %168 = vmatpush1.msra.mxu0 %v137
    %169 = vmatprep.subr.mxu0 0.0
    %170 = vmatpush1.msra.mxu0 %v138
    %171 = vmatprep.subr.mxu0 0.0
    %172 = vmatpush1.msra.mxu0 %v139
    %173 = vmatprep.subr.mxu0 0.0
    %174 = vmatpush1.msra.mxu0 %v140
    %175 = vmatprep.subr.mxu0 0.0
    %176 = vmatpush1.msra.mxu0 %v141
    %177 = vmatprep.subr.mxu0 0.0
    %178 = vmatpush1.msra.mxu0 %v142
    %179 = vmatprep.subr.mxu0 0.0
    %180 = vmatpush1.msra.mxu0 %v143
    %181 = vmatprep.subr.mxu0 0.0
    %182 = vmatpush1.msra.mxu0 %v144
    %183 = vmatprep.subr.mxu0 0.0
    %184 = vmatpush1.msra.mxu0 %v145
    %185 = vmatprep.subr.mxu0 0.0
    %186 = vmatpush1.msra.mxu0 0.0
    %187 = vmatprep.subr.mxu0 0.0
    %188 = vmatpush1.msra.mxu0 0.0
    %189 = vmatprep.subr.mxu0 0.0
    %190 = vmatpush1.msra.mxu0 0.0
    %191 = vmatprep.subr.mxu0 0.0
    %192 = vmatpush1.msra.mxu0 0.0
    %193 = vmatprep.subr.mxu0 0.0
    %194 = vmatpush1.msra.mxu0 0.0
    %195 = vmatprep.subr.mxu0 0.0
    %196 = vmatpush1.msra.mxu0 0.0
    %197 = vmatprep.subr.mxu0 0.0
    %198 = vmatpush1.msra.mxu0 0.0
    %199 = vmatprep.subr.mxu0 0.0
    %200 = vmatpush1.msra.mxu0 0.0
    %201 = vmatprep.subr.mxu0 0.0
    %202 = vmatpush1.msra.mxu0 0.0
    %203 = vmatprep.subr.mxu0 0.0
    %204 = vmatpush1.msra.mxu0 0.0
    %205 = vmatprep.subr.mxu0 0.0
    %206 = vmatpush1.msra.mxu0 0.0
    %207 = vmatprep.subr.mxu0 0.0
    %208 = vmatpush1.msra.mxu0 0.0
    %209 = vmatprep.subr.mxu0 0.0
    %210 = vmatpush1.msra.mxu0 0.0
    %211 = vmatprep.subr.mxu0 0.0
    %212 = vmatpush1.msra.mxu0 0.0
    %213 = vmatprep.subr.mxu0 0.0
    %214 = vmatpush1.msra.mxu0 0.0
    %215 = vmatprep.subr.mxu0 0.0
    %216 = vmatpush1.msra.mxu0 0.0
    %217 = vmatprep.mubr.f32.mxu0 0.0
    %218 = vmatmul.mubr.f32.gmra.mrb[0].mxu0 %v128
    %v219 = vpop.f32.mrb[0].mxu0
    %v220 = vadd.f32 %v151, %v219
    %v221 = vpop.f32.mrb[0].mxu0
    %222 = vmatprep.mubr.f32.mxu0 0.0
    %223 = vmatmul.mubr.f32.gmra.mrb[0].mxu0 %v129
    %v224 = vpop.f32.mrb[0].mxu0
    %v225 = vadd.f32 %v151, %v224
    %v226 = vpop.f32.mrb[0].mxu0
    %227 = vdwg.mxu0
    %228 = vst.msk [vmem:[#allocation2] sm:$0xff] %vm38, %v220
    %229 = vst.msk [vmem:[#allocation2 + $0x8] sm:$0xff] %vm38, %v225
    // Predicated region
    $region22: #{tpu_custom_call.1} parent=1 // pred_check
      _
    $region23: #{tpu_custom_call.1} parent=1 // pred_check_branch
      %231 = sbr.rel (0) target = $region25
    $region24: #{tpu_custom_call.1} parent=1 // pred_region
      %s233 = ssub.s32 256, 256
      %234 = vsyncadd [#allocation3], %s233
      %s235 = sshll.u32 [#allocation2], 4
      %s236 = int_to_ptr.vmem [resolvable:$true] %s235
      %241 = dma.vmem_to_hbm [thread:$0]  %s236, 256, %s5, [#allocation3], 128, 128, 8
    $region25: #{tpu_custom_call.1} parent=1 // pred_fallthru
      _
    // Predicated region
    $region26: #{tpu_custom_call.1} parent=1 // pred_check
      _
    $region27: #{tpu_custom_call.1} parent=1 // pred_check_branch
      %243 = sbr.rel (0) target = $region29
    $region28: #{tpu_custom_call.1} parent=1 // pred_region
      %244 = dma.done [#allocation3], 256
    $region29: #{tpu_custom_call.1} parent=1 // pred_fallthru
      _
    %245 = vsyncpa [#allocation3], 1

</llo_original>
